<compile_context>
chip_gen: v5e
topology: v5e:2x2
jax: 0.10.0
libtpu: 0.0.40
codegen_flags: <defaults>
</compile_context>

<pallas_src>
import jax
import jax.numpy as jnp
from jax.experimental import pallas as pl
from jax.experimental.pallas import tpu as pltpu


def mlp_kernel(x_ref, w1_ref, b1_ref, w2_ref, b2_ref, w3_ref, b3_ref, o_ref):
    # fc1 + relu  (bf16 MXU matmul, f32 accumulate / bias / activation)
    h1 = jnp.dot(x_ref[...], w1_ref[...],
                 preferred_element_type=jnp.float32) + b1_ref[...]
    h1 = jnp.maximum(h1, 0.0)
    # fc2 + relu
    h2 = jnp.dot(h1.astype(jnp.bfloat16), w2_ref[...],
                 preferred_element_type=jnp.float32) + b2_ref[...]
    h2 = jnp.maximum(h2, 0.0)
    # fc3 (logits, no activation)
    o_ref[...] = (jnp.dot(h2.astype(jnp.bfloat16), w3_ref[...],
                          preferred_element_type=jnp.float32)
                  + b3_ref[...]).astype(o_ref.dtype)


def _round_up(n, m):
    return ((n + m - 1) // m) * m


def genre_classifier_forward(x, params, *, block_batch=1024):
    """x: (B, input_size) float32. params: dict of (w1,b1,w2,b2,w3,b3).

    Weights/x are cast to bf16 for the MXU; accumulation and the returned
    logits are f32. Batch is tiled in TB-row blocks (TB <= block_batch,
    multiple of 8) and padded up to a multiple of TB; padding is sliced off.
    """
    w1 = params["w1"].astype(jnp.bfloat16)
    w2 = params["w2"].astype(jnp.bfloat16)
    w3 = params["w3"].astype(jnp.bfloat16)
    b1 = params["b1"].astype(jnp.float32)
    b2 = params["b2"].astype(jnp.float32)
    b3 = params["b3"].astype(jnp.float32)

    B, in_sz = x.shape
    num_classes = w3.shape[1]

    # Batch tile: as large as block_batch, but no larger than the (8-aligned)
    # batch itself so tiny batches don't pay for padded work.
    tb = min(block_batch, _round_up(B, 8))
    b_pad = _round_up(B, tb)

    xb = x.astype(jnp.bfloat16)
    if b_pad != B:
        xb = jnp.pad(xb, ((0, b_pad - B), (0, 0)))

    grid = (b_pad // tb,)
    resident = lambda i: (0, 0)   # weights/biases: same block every step -> stay in VMEM

    out = pl.pallas_call(
        mlp_kernel,
        out_shape=jax.ShapeDtypeStruct((b_pad, num_classes), jnp.float32),
        grid=grid,
        in_specs=[
            pl.BlockSpec((tb, in_sz), lambda i: (i, 0)),   # x: streamed per tile
            pl.BlockSpec(w1.shape, resident),
            pl.BlockSpec(b1.shape, resident),
            pl.BlockSpec(w2.shape, resident),
            pl.BlockSpec(b2.shape, resident),
            pl.BlockSpec(w3.shape, resident),
            pl.BlockSpec(b3.shape, resident),
        ],
        out_specs=pl.BlockSpec((tb, num_classes), lambda i: (i, 0)),
        compiler_params=pltpu.CompilerParams(
            dimension_semantics=("parallel",)),   # lets v7x shard tiles across its 2 TCs
    )(xb, w1, b1, w2, b2, w3, b3)

    return out[:B]


def init_params(key, input_size, num_classes):
    """Deterministic init mirroring nn.Linear shapes (weights kept as (in, out))."""
    k1, k2, k3, k4, k5, k6 = jax.random.split(key, 6)

    def uinit(k, shape, fan_in):
        bound = 1.0 / jnp.sqrt(fan_in)
        return jax.random.uniform(k, shape, jnp.float32, -bound, bound)

    return {
        "w1": uinit(k1, (input_size, 128), input_size),
        "b1": uinit(k2, (1, 128), input_size),
        "w2": uinit(k3, (128, 64), 128),
        "b2": uinit(k4, (1, 64), 128),
        "w3": uinit(k5, (64, num_classes), 64),
        "b3": uinit(k6, (1, num_classes), 64),
    }


if __name__ == "__main__":
    key = jax.random.PRNGKey(0)
    kx, kp = jax.random.split(key)

    batch = 8
    input_size = 32      # e.g. audio feature vector length
    num_classes = 10     # number of genres

    x = jax.random.normal(kx, (batch, input_size), dtype=jnp.float32)
    params = init_params(kp, input_size, num_classes)

    out = genre_classifier_forward(x, params)
    out = jax.block_until_ready(out)

    # plain-JAX reference with the SAME bf16 input/weight rounding (f32 accumulate)
    def q(a):
        return a.astype(jnp.bfloat16).astype(jnp.float32)

    h1 = jnp.maximum(q(x) @ q(params["w1"]) + params["b1"], 0.0)
    h2 = jnp.maximum(q(h1) @ q(params["w2"]) + params["b2"], 0.0)
    ref = q(h2) @ q(params["w3"]) + params["b3"]

    assert out.shape == (batch, num_classes)
    assert jnp.allclose(out, ref, atol=1e-3, rtol=1e-3), "mismatch vs reference"

    print("KERNEL_OK")
</pallas_src>

<mosaic_0001>
module attributes {stable_mosaic.version = 11 : i64} {
  func.func @mlp_kernel(%arg0: i32, %arg1: memref<8x32xbf16, #tpu.memory_space<vmem>>, %arg2: memref<32x128xbf16, #tpu.memory_space<vmem>>, %arg3: memref<1x128xf32, #tpu.memory_space<vmem>>, %arg4: memref<128x64xbf16, #tpu.memory_space<vmem>>, %arg5: memref<1x64xf32, #tpu.memory_space<vmem>>, %arg6: memref<64x10xbf16, #tpu.memory_space<vmem>>, %arg7: memref<1x10xf32, #tpu.memory_space<vmem>>, %arg8: memref<8x10xf32, #tpu.memory_space<vmem>>) attributes {dimension_semantics = [#tpu.dimension_semantics<parallel>], iteration_bounds = array<i64: 1>, scalar_prefetch = 0 : i64, scratch_operands = 0 : i64, tpu.core_type = #tpu.core_type<tc>, window_params = [{transform_indices = @transform_0, window_bounds = array<i64: 8, 32>}, {pipeline_mode = #tpu.pipeline_mode<synchronous>, transform_indices = @transform_1, window_bounds = array<i64: 32, 128>}, {pipeline_mode = #tpu.pipeline_mode<synchronous>, transform_indices = @transform_2, window_bounds = array<i64: 1, 128>}, {pipeline_mode = #tpu.pipeline_mode<synchronous>, transform_indices = @transform_3, window_bounds = array<i64: 128, 64>}, {pipeline_mode = #tpu.pipeline_mode<synchronous>, transform_indices = @transform_4, window_bounds = array<i64: 1, 64>}, {pipeline_mode = #tpu.pipeline_mode<synchronous>, transform_indices = @transform_5, window_bounds = array<i64: 64, 10>}, {pipeline_mode = #tpu.pipeline_mode<synchronous>, transform_indices = @transform_6, window_bounds = array<i64: 1, 10>}, {transform_indices = @transform_7, window_bounds = array<i64: 8, 10>}]} {
    %c0 = arith.constant 0 : index
    %c0_0 = arith.constant 0 : index
    %0 = vector.load %arg1[%c0, %c0_0] : memref<8x32xbf16, #tpu.memory_space<vmem>>, vector<8x32xbf16>
    %c0_1 = arith.constant 0 : index
    %c0_2 = arith.constant 0 : index
    %1 = vector.load %arg2[%c0_1, %c0_2] : memref<32x128xbf16, #tpu.memory_space<vmem>>, vector<32x128xbf16>
    %cst = arith.constant dense<0.000000e+00> : vector<8x128xf32>
    %2 = tpu.matmul %0, %1, %cst {dimension_numbers = #tpu.dot_dimension_numbers<[1], [0], [0], [1], [0, 0, 1, 1], [], []>} : vector<8x32xbf16>, vector<32x128xbf16>, vector<8x128xf32> -> vector<8x128xf32>
    %c0_3 = arith.constant 0 : index
    %c0_4 = arith.constant 0 : index
    %3 = vector.load %arg3[%c0_3, %c0_4] : memref<1x128xf32, #tpu.memory_space<vmem>>, vector<1x128xf32>
    %4 = vector.broadcast %3 : vector<1x128xf32> to vector<8x128xf32>
    %5 = arith.addf %2, %4 : vector<8x128xf32>
    %cst_5 = arith.constant 0.000000e+00 : f32
    %6 = vector.broadcast %cst_5 : f32 to vector<8x128xf32>
    %7 = arith.maximumf %5, %6 : vector<8x128xf32>
    %8 = arith.truncf %7 : vector<8x128xf32> to vector<8x128xbf16>
    %c0_6 = arith.constant 0 : index
    %c0_7 = arith.constant 0 : index
    %9 = vector.load %arg4[%c0_6, %c0_7] : memref<128x64xbf16, #tpu.memory_space<vmem>>, vector<128x64xbf16>
    %cst_8 = arith.constant dense<0.000000e+00> : vector<8x64xf32>
    %10 = tpu.matmul %8, %9, %cst_8 {dimension_numbers = #tpu.dot_dimension_numbers<[1], [0], [0], [1], [0, 0, 1, 1], [], []>} : vector<8x128xbf16>, vector<128x64xbf16>, vector<8x64xf32> -> vector<8x64xf32>
    %c0_9 = arith.constant 0 : index
    %c0_10 = arith.constant 0 : index
    %11 = vector.load %arg5[%c0_9, %c0_10] : memref<1x64xf32, #tpu.memory_space<vmem>>, vector<1x64xf32>
    %12 = vector.broadcast %11 : vector<1x64xf32> to vector<8x64xf32>
    %13 = arith.addf %10, %12 : vector<8x64xf32>
    %cst_11 = arith.constant 0.000000e+00 : f32
    %14 = vector.broadcast %cst_11 : f32 to vector<8x64xf32>
    %15 = arith.maximumf %13, %14 : vector<8x64xf32>
    %16 = arith.truncf %15 : vector<8x64xf32> to vector<8x64xbf16>
    %c0_12 = arith.constant 0 : index
    %c0_13 = arith.constant 0 : index
    %17 = vector.load %arg6[%c0_12, %c0_13] : memref<64x10xbf16, #tpu.memory_space<vmem>>, vector<64x10xbf16>
    %cst_14 = arith.constant dense<0.000000e+00> : vector<8x10xf32>
    %18 = tpu.matmul %16, %17, %cst_14 {dimension_numbers = #tpu.dot_dimension_numbers<[1], [0], [0], [1], [0, 0, 1, 1], [], []>} : vector<8x64xbf16>, vector<64x10xbf16>, vector<8x10xf32> -> vector<8x10xf32>
    %c0_15 = arith.constant 0 : index
    %c0_16 = arith.constant 0 : index
    %19 = vector.load %arg7[%c0_15, %c0_16] : memref<1x10xf32, #tpu.memory_space<vmem>>, vector<1x10xf32>
    %20 = vector.broadcast %19 : vector<1x10xf32> to vector<8x10xf32>
    %21 = arith.addf %18, %20 : vector<8x10xf32>
    %c0_17 = arith.constant 0 : index
    %c0_18 = arith.constant 0 : index
    %22 = vector.load %arg8[%c0_17, %c0_18] : memref<8x10xf32, #tpu.memory_space<vmem>>, vector<8x10xf32>
    tpu.vector_store %arg8[%c0_17, %c0_18], %21 {strides = array<i32>} : memref<8x10xf32, #tpu.memory_space<vmem>>, vector<8x10xf32>,
    return
  }
  func.func @transform_0(%arg0: i32) -> (i32, i32) {
    %c0_i32 = arith.constant 0 : i32
    %c0_i32_0 = arith.constant 0 : i32
    return %arg0, %c0_i32 : i32, i32
  }
  func.func @transform_1(%arg0: i32) -> (i32, i32) {
    %c0_i32 = arith.constant 0 : i32
    %c0_i32_0 = arith.constant 0 : i32
    %c0_i32_1 = arith.constant 0 : i32
    return %c0_i32, %c0_i32_0 : i32, i32
  }
  func.func @transform_2(%arg0: i32) -> (i32, i32) {
    %c0_i32 = arith.constant 0 : i32
    %c0_i32_0 = arith.constant 0 : i32
    %c0_i32_1 = arith.constant 0 : i32
    return %c0_i32, %c0_i32_0 : i32, i32
  }
  func.func @transform_3(%arg0: i32) -> (i32, i32) {
    %c0_i32 = arith.constant 0 : i32
    %c0_i32_0 = arith.constant 0 : i32
    %c0_i32_1 = arith.constant 0 : i32
    return %c0_i32, %c0_i32_0 : i32, i32
  }
  func.func @transform_4(%arg0: i32) -> (i32, i32) {
    %c0_i32 = arith.constant 0 : i32
    %c0_i32_0 = arith.constant 0 : i32
    %c0_i32_1 = arith.constant 0 : i32
    return %c0_i32, %c0_i32_0 : i32, i32
  }
  func.func @transform_5(%arg0: i32) -> (i32, i32) {
    %c0_i32 = arith.constant 0 : i32
    %c0_i32_0 = arith.constant 0 : i32
    %c0_i32_1 = arith.constant 0 : i32
    return %c0_i32, %c0_i32_0 : i32, i32
  }
  func.func @transform_6(%arg0: i32) -> (i32, i32) {
    %c0_i32 = arith.constant 0 : i32
    %c0_i32_0 = arith.constant 0 : i32
    %c0_i32_1 = arith.constant 0 : i32
    return %c0_i32, %c0_i32_0 : i32, i32
  }
  func.func @transform_7(%arg0: i32) -> (i32, i32) {
    %c0_i32 = arith.constant 0 : i32
    %c0_i32_0 = arith.constant 0 : i32
    return %arg0, %c0_i32 : i32, i32
  }
}

</mosaic_0001>

<llo_original>
// kernel: tpu_custom_call.1
$region0: #{tpu_custom_call.1}
  #allocation0 [shape = 'u32[]', space=smem, size = 0x4, offset = 0x4, fixed_abs, tag = 'smem constant byte address 0x4 - core index']
  #allocation1 [shape = 'u32[72,128]{1,0:T(1,128)}', space=vmem, size = 0x9000, scoped, tag = 'internal scratch']
  %s0 = inlined_call_operand.vmem [shape: bf16[8,32], index: 0, kind: input, shape index: {}]
  %s1 = inlined_call_operand.vmem [shape: bf16[32,128], index: 1, kind: input, shape index: {}]
  %s2 = inlined_call_operand.vmem [shape: f32[1,128], index: 2, kind: input, shape index: {}]
  %s3 = inlined_call_operand.vmem [shape: bf16[128,64], index: 3, kind: input, shape index: {}]
  %s4 = inlined_call_operand.vmem [shape: f32[1,64], index: 4, kind: input, shape index: {}]
  %s5 = inlined_call_operand.vmem [shape: bf16[64,10], index: 5, kind: input, shape index: {}]
  %s6 = inlined_call_operand.vmem [shape: f32[1,10], index: 6, kind: input, shape index: {}]
  %s7 = inlined_call_operand.hbm [shape: f32[8,10], index: 7, kind: output, shape index: {}]
  %s8 = sld [smem:[#allocation0]]
  $region38: #{tpu_custom_call.1} parent=0
    _
  %s10 = ssub.s32 1, %s8
  %s11 = scalar_select 0, %s10, %s8
  $region1: #{tpu_custom_call.1} parent=0
    #allocation2 [shape = 'u8[4096]{0}', space=vmem, size = 0x1000, scoped, tag = 'output window, operand 0, single buffered']
    #allocation3 [shape = 's32[1]{0}', space=sflag, size = 0x4, scoped, tag = 'scoped memory for tpu_custom_call.1']
    %12 = vsyncpa [#allocation3], 0
    // Predicated region
    $region2: #{tpu_custom_call.1} parent=1 // pred_check
      _
    $region3: #{tpu_custom_call.1} parent=1 // pred_check_branch
      %14 = sbr.rel (0) target = $region5
    $region4: #{tpu_custom_call.1} parent=1 // pred_region
      _
    $region5: #{tpu_custom_call.1} parent=1 // pred_fallthru
      _
    // Predicated region
    $region6: #{tpu_custom_call.1} parent=1 // pred_check
      _
    $region7: #{tpu_custom_call.1} parent=1 // pred_check_branch
      %16 = sbr.rel (0) target = $region9
    $region8: #{tpu_custom_call.1} parent=1 // pred_region
      _
    $region9: #{tpu_custom_call.1} parent=1 // pred_fallthru
      _
    // Predicated region
    $region10: #{tpu_custom_call.1} parent=1 // pred_check
      _
    $region11: #{tpu_custom_call.1} parent=1 // pred_check_branch
      %18 = sbr.rel (0) target = $region13
    $region12: #{tpu_custom_call.1} parent=1 // pred_region
      _
    $region13: #{tpu_custom_call.1} parent=1 // pred_fallthru
      _
    // Predicated region
    $region14: #{tpu_custom_call.1} parent=1 // pred_check
      _
    $region15: #{tpu_custom_call.1} parent=1 // pred_check_branch
      %20 = sbr.rel (0) target = $region17
    $region16: #{tpu_custom_call.1} parent=1 // pred_region
      _
    $region17: #{tpu_custom_call.1} parent=1 // pred_fallthru
      _
    // Predicated region
    $region18: #{tpu_custom_call.1} parent=1 // pred_check
      _
    $region19: #{tpu_custom_call.1} parent=1 // pred_check_branch
      %22 = sbr.rel (0) target = $region21
    $region20: #{tpu_custom_call.1} parent=1 // pred_region
      _
    $region21: #{tpu_custom_call.1} parent=1 // pred_fallthru
      _
    // Predicated region
    $region22: #{tpu_custom_call.1} parent=1 // pred_check
      _
    $region23: #{tpu_custom_call.1} parent=1 // pred_check_branch
      %24 = sbr.rel (0) target = $region25
    $region24: #{tpu_custom_call.1} parent=1 // pred_region
      _
    $region25: #{tpu_custom_call.1} parent=1 // pred_fallthru
      _
    // Predicated region
    $region26: #{tpu_custom_call.1} parent=1 // pred_check
      _
    $region27: #{tpu_custom_call.1} parent=1 // pred_check_branch
      %26 = sbr.rel (0) target = $region29
    $region28: #{tpu_custom_call.1} parent=1 // pred_region
      _
    $region29: #{tpu_custom_call.1} parent=1 // pred_fallthru
      _
    %v28 = vld [vmem:[%s0] sm:$0xf]
    %v29 = vld [vmem:[%s1] sm:$0xf]
    %v30 = vld [vmem:[%s1 + $0x4] sm:$0xf]
    %v31 = vld [vmem:[%s1 + $0x8] sm:$0xf]
    %v32 = vld [vmem:[%s1 + $0xc] sm:$0xf]
    %v33 = vld [vmem:[%s2] sm:$0x1]
    %v35 = vperm.slane %v33, 0
    %v41 = vunpack.c.l.b16 %v29
    %v42 = vunpack.c.l.b16 %v30
    %v43 = vunpack.c.l.b16 %v31
    %v44 = vunpack.c.l.b16 %v32
    %v45 = vpack.c.b16 %v42, %v41
    %v46 = vpack.c.b16 %v44, %v43
    %vm49 = vcmask 261120
    %v51 = vsel %vm49, %v28, 0
    %53 = vmatpush.bf16.msra.mxu0 0
    %54 = vmatpush.bf16.msra.mxu0 0
    %55 = vmatpush.bf16.msra.mxu0 0
    %56 = vmatpush.bf16.msra.mxu0 0
    %57 = vmatpush.bf16.msra.mxu0 0
    %58 = vmatpush.bf16.msra.mxu0 0
    %59 = vmatpush.bf16.msra.mxu0 %v46
    %60 = vmatpush.bf16.msra.mxu0 %v45
    %61 = vmatmul.bf16.gmra.mxu0 %v51
    %v62 = vpop.f32.mrf.mxu0
    %v63 = vadd.f32 %v35, %v62
    %v64 = vpop.f32.mrf.mxu0
    %65 = vdwg.mxu0
    %v66 = vmax.f32 %v63, 0.0
    %v67 = vpack.c.bf16 %v66, %v66
    %v68 = vld [vmem:[%s3] sm:$0xf]
    %v69 = vld [vmem:[%s3 + $0x4] sm:$0xf]
    %v70 = vld [vmem:[%s3 + $0x8] sm:$0xf]
    %v71 = vld [vmem:[%s3 + $0xc] sm:$0xf]
    %v72 = vld [vmem:[%s3 + $0x10] sm:$0xf]
    %v73 = vld [vmem:[%s3 + $0x14] sm:$0xf]
    %v74 = vld [vmem:[%s3 + $0x18] sm:$0xf]
    %v75 = vld [vmem:[%s3 + $0x1c] sm:$0xf]
    %v76 = vld [vmem:[%s3 + $0x20] sm:$0xf]
    %v77 = vld [vmem:[%s3 + $0x24] sm:$0xf]
    %v78 = vld [vmem:[%s3 + $0x28] sm:$0xf]
    %v79 = vld [vmem:[%s3 + $0x2c] sm:$0xf]
    %v80 = vld [vmem:[%s3 + $0x30] sm:$0xf]
    %v81 = vld [vmem:[%s3 + $0x34] sm:$0xf]
    %v82 = vld [vmem:[%s3 + $0x38] sm:$0xf]
    %v83 = vld [vmem:[%s3 + $0x3c] sm:$0xf]
    %v84 = vld [vmem:[%s4] sm:$0x1]
    %v86 = vperm.slane %v84, 0
    %v104 = vunpack.c.l.b16 %v68
    %v105 = vunpack.c.l.b16 %v69
    %v106 = vunpack.c.l.b16 %v70
    %v107 = vunpack.c.l.b16 %v71
    %v108 = vunpack.c.l.b16 %v72
    %v109 = vunpack.c.l.b16 %v73
    %v110 = vunpack.c.l.b16 %v74
    %v111 = vunpack.c.l.b16 %v75
    %v112 = vunpack.c.l.b16 %v76
    %v113 = vunpack.c.l.b16 %v77
    %v114 = vunpack.c.l.b16 %v78
    %v115 = vunpack.c.l.b16 %v79
    %v116 = vunpack.c.l.b16 %v80
    %v117 = vunpack.c.l.b16 %v81
    %v118 = vunpack.c.l.b16 %v82
    %v119 = vunpack.c.l.b16 %v83
    %v120 = vpack.c.b16 %v105, %v104
    %v121 = vpack.c.b16 %v107, %v106
    %v122 = vpack.c.b16 %v109, %v108
    %v123 = vpack.c.b16 %v111, %v110
    %v124 = vpack.c.b16 %v113, %v112
    %v125 = vpack.c.b16 %v115, %v114
    %v126 = vpack.c.b16 %v117, %v116
    %v127 = vpack.c.b16 %v119, %v118
    %136 = vmatpush.bf16.msra.mxu0 %v127
    %137 = vmatpush.bf16.msra.mxu0 %v126
    %138 = vmatpush.bf16.msra.mxu0 %v125
    %139 = vmatpush.bf16.msra.mxu0 %v124
    %140 = vmatpush.bf16.msra.mxu0 %v123
    %141 = vmatpush.bf16.msra.mxu0 %v122
    %142 = vmatpush.bf16.msra.mxu0 %v121
    %143 = vmatpush.bf16.msra.mxu0 %v120
    %144 = vmatmul.bf16.gmra.mxu0 %v67
    %v145 = vpop.f32.mrf.mxu0
    %v146 = vadd.f32 %v86, %v145
    %v147 = vpop.f32.mrf.mxu0
    %148 = vdwg.mxu0
    %v149 = vmax.f32 %v146, 0.0
    %v150 = vpack.c.bf16 %v149, %v149
    %v151 = vld [vmem:[%s5] sm:$0xf]
    %v152 = vld [vmem:[%s5 + $0x4] sm:$0xf]
    %v153 = vld [vmem:[%s5 + $0x8] sm:$0xf]
    %v154 = vld [vmem:[%s5 + $0xc] sm:$0xf]
    %v155 = vld [vmem:[%s5 + $0x10] sm:$0xf]
    %v156 = vld [vmem:[%s5 + $0x14] sm:$0xf]
    %v157 = vld [vmem:[%s5 + $0x18] sm:$0xf]
    %v158 = vld [vmem:[%s5 + $0x1c] sm:$0xf]
    %v159 = vld [vmem:[%s6] sm:$0x1]
    %v161 = vperm.slane %v159, 0
    %v171 = vunpack.c.l.b16 %v151
    %v172 = vunpack.c.l.b16 %v152
    %v173 = vunpack.c.l.b16 %v153
    %v174 = vunpack.c.l.b16 %v154
    %v175 = vunpack.c.l.b16 %v155
    %v176 = vunpack.c.l.b16 %v156
    %v177 = vunpack.c.l.b16 %v157
    %v178 = vunpack.c.l.b16 %v158
    %v179 = vpack.c.b16 %v172, %v171
    %v180 = vpack.c.b16 %v174, %v173
    %v181 = vpack.c.b16 %v176, %v175
    %v182 = vpack.c.b16 %v178, %v177
    %vm187 = vcmask 523264
    %v189 = vsel %vm187, %v150, 0
    %191 = vmatpush.bf16.msra.mxu0 0
    %192 = vmatpush.bf16.msra.mxu0 0
    %193 = vmatpush.bf16.msra.mxu0 0
    %194 = vmatpush.bf16.msra.mxu0 0
    %195 = vmatpush.bf16.msra.mxu0 %v182
    %196 = vmatpush.bf16.msra.mxu0 %v181
    %197 = vmatpush.bf16.msra.mxu0 %v180
    %198 = vmatpush.bf16.msra.mxu0 %v179
    %199 = vmatmul.bf16.gmra.mxu0 %v189
    %v200 = vpop.f32.mrf.mxu0
    %v201 = vadd.f32 %v161, %v200
    %v202 = vpop.f32.mrf.mxu0
    %203 = vdwg.mxu0
    %vm204 = vcmask 80896
    %205 = vst.msk [vmem:[#allocation2] sm:$0xff] %vm204, %v201
    // Predicated region
    $region30: #{tpu_custom_call.1} parent=1 // pred_check
      _
    $region31: #{tpu_custom_call.1} parent=1 // pred_check_branch
      %207 = sbr.rel (0) target = $region33
    $region32: #{tpu_custom_call.1} parent=1 // pred_region
      %209 = vsyncadd [#allocation3], 0
      %s211 = sshll.u32 [#allocation2], 4
      %s212 = int_to_ptr.vmem [resolvable:$true] %s211
      %s213 = sshll.u32 %s7, 4
      %s214 = int_to_ptr.hbm [resolvable:$true] %s213
      %216 = dma.vmem_to_hbm [thread:$0]  %s212, 128, %s214, [#allocation3]
    $region33: #{tpu_custom_call.1} parent=1 // pred_fallthru
      _
    // Predicated region
    $region34: #{tpu_custom_call.1} parent=1 // pred_check
      _
    $region35: #{tpu_custom_call.1} parent=1 // pred_check_branch
      %218 = sbr.rel (0) target = $region37
    $region36: #{tpu_custom_call.1} parent=1 // pred_region
      %220 = dma.done [#allocation3], 128
    $region37: #{tpu_custom_call.1} parent=1 // pred_fallthru
      _
    %221 = vsyncpa [#allocation3], 1

</llo_original>
